<compile_context>
chip_gen: v7x
topology: tpu7x:2x2x1
jax: 0.10.0
libtpu: 0.0.40
codegen_flags: <defaults>
</compile_context>

<pallas_src>
import math
import functools

import jax
import jax.numpy as jnp
from jax.experimental import pallas as pl
from jax.experimental.pallas import tpu as pltpu


def _seq_tile(length, row_bytes, budget_bytes=4 << 20):
    """Tile along the tiled axis: whole axis if it fits the budget, otherwise
    the largest multiple of 8 whose x-block stays under ~budget_bytes."""
    if length * row_bytes <= budget_bytes:
        return length
    t = int(budget_bytes // max(row_bytes, 1)) // 8 * 8
    return max(8, min(t, length))


# ----------------------------------------------------------------------------
# PE (sinusoidal "Attention Is All You Need" encodings)
# ----------------------------------------------------------------------------
def _pe_kernel(x_ref, pe_ref, o_ref, *, seq_axis):
    x = x_ref[...].astype(jnp.float32)
    pe = pe_ref[...]                                # (tS, D) f32, hoisted table
    if seq_axis == 0:                               # x block: (tS, B, D)
        pe = pe[:, None, :]
    else:                                           # x block: (B, tS, D)
        pe = pe[None, :, :]
    o_ref[...] = (x + pe).astype(o_ref.dtype)


def _build_pe_table(S, d, base):
    # pe[s, 2i] = sin(s * base^(-2i/d));  pe[s, 2i+1] = cos(s * base^(-2i/d))
    pos = jnp.arange(S, dtype=jnp.float32)[:, None]
    div = jnp.exp(jnp.arange(0, d, 2, dtype=jnp.float32) * (-math.log(base) / d))
    angle = pos * div                               # (S, ceil(d/2))
    pe = jnp.zeros((S, d), jnp.float32)
    pe = pe.at[:, 0::2].set(jnp.sin(angle))
    pe = pe.at[:, 1::2].set(jnp.cos(angle)[:, : d // 2])
    return pe


def pe_forward(x, d, base=10000, batch_first=False):
    # Native layouts, no wrapper transpose: (S, B, D) or (B, S, D).
    seq_axis = 1 if batch_first else 0
    S = x.shape[seq_axis]
    B = x.shape[1 - seq_axis]
    D = x.shape[-1]
    # NOTE: like the reference module, the table has width `d`; the broadcast
    # add requires D == d.
    pe = _build_pe_table(S, d, base)                # (S, d) f32, built once

    row_bytes = B * D * x.dtype.itemsize
    tS = _seq_tile(S, row_bytes)
    grid = (pl.cdiv(S, tS),)

    if seq_axis == 0:
        x_spec = pl.BlockSpec((tS, B, D), lambda i: (i, 0, 0))
    else:
        x_spec = pl.BlockSpec((B, tS, D), lambda i: (0, i, 0))
    pe_spec = pl.BlockSpec((tS, D), lambda i: (i, 0))

    return pl.pallas_call(
        functools.partial(_pe_kernel, seq_axis=seq_axis),
        out_shape=jax.ShapeDtypeStruct(x.shape, x.dtype),
        grid_spec=pltpu.PrefetchScalarGridSpec(
            num_scalar_prefetch=0,
            grid=grid,
            in_specs=[x_spec, pe_spec],
            out_specs=x_spec,
        ),
        compiler_params=pltpu.CompilerParams(dimension_semantics=("parallel",)),
    )(x, pe)


# ----------------------------------------------------------------------------
# RoPE (rotary positional embeddings, reproducing the module's exact behavior)
# ----------------------------------------------------------------------------
def _rope_kernel(x_ref, cos_ref, sin_ref, o_ref, *, d, rot_axis):
    d_2 = d // 2
    x = x_ref[...]
    nd = x.ndim
    # Broadcast the hoisted (n, d_2) tables against x[..., :d_2].
    bidx = [None] * nd
    bidx[rot_axis] = slice(None)
    bidx[-1] = slice(None)
    cos_h = cos_ref[...][tuple(bidx)]
    sin_h = sin_ref[...][tuple(bidx)]

    x_lo = x[..., :d_2].astype(jnp.float32)
    x_hi = x[..., d_2:d].astype(jnp.float32)
    # Pair rotation; sliced stores instead of lane-axis concatenation:
    #   out[:d_2]  = x_lo * cos - x_hi * sin
    #   out[d_2:d] = x_hi * cos + x_lo * sin
    o_ref[..., :d_2] = (x_lo * cos_h - x_hi * sin_h).astype(o_ref.dtype)
    o_ref[..., d_2:d] = (x_hi * cos_h + x_lo * sin_h).astype(o_ref.dtype)
    if d < x.shape[-1]:
        o_ref[..., d:] = x[..., d:]                 # pass-through features


def rope_forward(x, d, base=10000, batch_first=False):
    ndim = x.ndim
    assert ndim in (3, 4), "RoPE expects 3-D or 4-D input"
    # Reference module permutes to put head (or batch, for 3-D) first before
    # building the cache -> rotation index is the head/batch axis.
    if ndim == 4:
        rot_axis = 2                                # H axis in both layouts
        tile_axis = 1 if batch_first else 0         # tile along the S axis
    else:
        if batch_first:                             # (B, S, Df): rot by B
            rot_axis, tile_axis = 0, 1
        else:                                       # (S, B, Df): rot by B
            rot_axis, tile_axis = 1, 0
    n = x.shape[rot_axis]
    d_2 = d // 2                                    # even d assumed

    # Hoisted half-width cos/sin tables (built once, f32, wrapper-side).
    theta = jnp.exp(jnp.arange(0, d, 2, dtype=jnp.float32) * (-math.log(base) / d))
    angle = jnp.arange(n, dtype=jnp.float32)[:, None] * theta[None, :]  # (n, d_2)
    cos_h = jnp.cos(angle)
    sin_h = jnp.sin(angle)

    L = x.shape[tile_axis]
    row_bytes = (x.size // L) * x.dtype.itemsize
    tL = _seq_tile(L, row_bytes)
    grid = (pl.cdiv(L, tL),)

    blk = list(x.shape)
    blk[tile_axis] = tL

    def x_map(i, _ta=tile_axis, _nd=ndim):
        out = [0] * _nd
        out[_ta] = i
        return tuple(out)

    x_spec = pl.BlockSpec(tuple(blk), x_map)
    tbl_spec = pl.BlockSpec((n, d_2), lambda i: (0, 0))  # constant: no re-DMA

    return pl.pallas_call(
        functools.partial(_rope_kernel, d=d, rot_axis=rot_axis),
        out_shape=jax.ShapeDtypeStruct(x.shape, x.dtype),
        grid_spec=pltpu.PrefetchScalarGridSpec(
            num_scalar_prefetch=0,
            grid=grid,
            in_specs=[x_spec, tbl_spec, tbl_spec],
            out_specs=x_spec,
        ),
        compiler_params=pltpu.CompilerParams(dimension_semantics=("parallel",)),
    )(x, cos_h, sin_h)


def positional_encodings(x, pe_type, d, base=10000, batch_first=False):
    if pe_type == "PE":
        return pe_forward(x, d, base=base, batch_first=batch_first)
    elif pe_type == "RoPE":
        return rope_forward(x, d, base=base, batch_first=batch_first)
    raise NotImplementedError(pe_type)


# ----------------------------------------------------------------------------
# Pure-JAX references (mirror the PyTorch module line-by-line)
# ----------------------------------------------------------------------------
def _pe_ref(x, d, base, batch_first):
    if not batch_first:
        x = jnp.swapaxes(x, 0, 1)
    S = x.shape[1]
    seq_len = 2 * S
    pos = jnp.arange(seq_len, dtype=jnp.float32)[:, None]
    div = jnp.exp(jnp.arange(0, d, 2, dtype=jnp.float32) * (-math.log(base) / d))
    pe = jnp.zeros((seq_len, d), jnp.float32)
    pe = pe.at[:, 0::2].set(jnp.sin(pos * div))
    pe = pe.at[:, 1::2].set(jnp.cos(pos * div))
    x = x + pe[None, :S, :]
    if not batch_first:
        x = jnp.swapaxes(x, 0, 1)
    return x


def _rope_ref(x, d, base, batch_first):
    ndim = x.ndim
    if batch_first:
        x = jnp.swapaxes(x, 0, 1)
    if ndim == 3:
        x = x[:, None]
    xp = jnp.transpose(x, (2, 0, 1, 3))
    n = xp.shape[0]
    theta = 1.0 / (base ** (jnp.arange(0, d, 2, dtype=jnp.float32) / d))
    idx = jnp.arange(2 * n, dtype=jnp.float32)
    idx_theta = jnp.einsum("n,d->nd", idx, theta)
    idx_theta2 = jnp.concatenate([idx_theta, idx_theta], axis=1)
    cosc = jnp.cos(idx_theta2)[:, None, None, :]
    sinc = jnp.sin(idx_theta2)[:, None, None, :]
    x_rope, x_pass = xp[..., :d], xp[..., d:]
    d_2 = d // 2
    neg = jnp.concatenate([-x_rope[..., d_2:], x_rope[..., :d_2]], axis=-1)
    x_rope = x_rope * cosc[:n] + neg * sinc[:n]
    out = jnp.concatenate([x_rope, x_pass], axis=-1)
    out = jnp.transpose(out, (1, 2, 0, 3))
    if ndim == 3:
        out = out[:, 0]
    if batch_first:
        out = jnp.swapaxes(out, 0, 1)
    return out


if __name__ == "__main__":
    key = jax.random.PRNGKey(0)
    k1, k2, k3 = jax.random.split(key, 3)

    # --- PE: x [seq=8, batch=2, d=32], d_model = 32 -------------------------
    d_pe = 32
    x_pe = jax.random.normal(k1, (8, 2, d_pe), dtype=jnp.float32)
    out_pe = jax.block_until_ready(positional_encodings(x_pe, "PE", d_pe))
    ref_pe = _pe_ref(x_pe, d_pe, 10000, False)
    assert out_pe.shape == x_pe.shape and out_pe.dtype == x_pe.dtype
    assert jnp.allclose(out_pe, ref_pe, atol=1e-4, rtol=1e-4)

    # --- RoPE 4D: x [seq=8, batch=2, heads=4, d_full=16], rotate first d=8 --
    d_rope, d_full = 8, 16
    x_ro = jax.random.normal(k2, (8, 2, 4, d_full), dtype=jnp.float32)
    out_ro = jax.block_until_ready(positional_encodings(x_ro, "RoPE", d_rope))
    ref_ro = _rope_ref(x_ro, d_rope, 10000, False)
    assert out_ro.shape == x_ro.shape and out_ro.dtype == x_ro.dtype
    assert jnp.allclose(out_ro, ref_ro, atol=1e-4, rtol=1e-4)

    # --- RoPE 3D: x [seq=8, batch=4, d_full=16] -----------------------------
    x_ro3 = jax.random.normal(k3, (8, 4, d_full), dtype=jnp.float32)
    out_ro3 = jax.block_until_ready(positional_encodings(x_ro3, "RoPE", d_rope))
    ref_ro3 = _rope_ref(x_ro3, d_rope, 10000, False)
    assert out_ro3.shape == x_ro3.shape
    assert jnp.allclose(out_ro3, ref_ro3, atol=1e-4, rtol=1e-4)

    print("KERNEL_OK")
</pallas_src>

<mosaic_0001>
module attributes {stable_mosaic.version = 11 : i64} {
  func.func @_pe_kernel(%arg0: i32, %arg1: memref<8x2x32xf32, #tpu.memory_space<vmem>>, %arg2: memref<8x32xf32, #tpu.memory_space<vmem>>, %arg3: memref<8x2x32xf32, #tpu.memory_space<vmem>>) attributes {dimension_semantics = [#tpu.dimension_semantics<parallel>], iteration_bounds = array<i64: 1>, scalar_prefetch = 0 : i64, scratch_operands = 0 : i64, tpu.core_type = #tpu.core_type<tc>, window_params = [{transform_indices = @transform_0, window_bounds = array<i64: 8, 2, 32>}, {transform_indices = @transform_1, window_bounds = array<i64: 8, 32>}, {transform_indices = @transform_2, window_bounds = array<i64: 8, 2, 32>}]} {
    %c0 = arith.constant 0 : index
    %c0_0 = arith.constant 0 : index
    %c0_1 = arith.constant 0 : index
    %0 = vector.load %arg1[%c0, %c0_0, %c0_1] : memref<8x2x32xf32, #tpu.memory_space<vmem>>, vector<8x2x32xf32>
    %c0_2 = arith.constant 0 : index
    %c0_3 = arith.constant 0 : index
    %1 = vector.load %arg2[%c0_2, %c0_3] : memref<8x32xf32, #tpu.memory_space<vmem>>, vector<8x32xf32>
    %2 = vector.shape_cast %1 : vector<8x32xf32> to vector<8x1x32xf32>
    %3 = vector.broadcast %2 : vector<8x1x32xf32> to vector<8x2x32xf32>
    %4 = arith.addf %0, %3 : vector<8x2x32xf32>
    %c0_4 = arith.constant 0 : index
    %c0_5 = arith.constant 0 : index
    %c0_6 = arith.constant 0 : index
    %5 = vector.load %arg3[%c0_4, %c0_5, %c0_6] : memref<8x2x32xf32, #tpu.memory_space<vmem>>, vector<8x2x32xf32>
    tpu.vector_store %arg3[%c0_4, %c0_5, %c0_6], %4 {strides = array<i32>} : memref<8x2x32xf32, #tpu.memory_space<vmem>>, vector<8x2x32xf32>,
    return
  }
  func.func @transform_0(%arg0: i32) -> (i32, i32, i32) {
    %c0_i32 = arith.constant 0 : i32
    %c0_i32_0 = arith.constant 0 : i32
    %c0_i32_1 = arith.constant 0 : i32
    return %arg0, %c0_i32, %c0_i32_0 : i32, i32, i32
  }
  func.func @transform_1(%arg0: i32) -> (i32, i32) {
    %c0_i32 = arith.constant 0 : i32
    %c0_i32_0 = arith.constant 0 : i32
    return %arg0, %c0_i32 : i32, i32
  }
  func.func @transform_2(%arg0: i32) -> (i32, i32, i32) {
    %c0_i32 = arith.constant 0 : i32
    %c0_i32_0 = arith.constant 0 : i32
    %c0_i32_1 = arith.constant 0 : i32
    return %arg0, %c0_i32, %c0_i32_0 : i32, i32, i32
  }
}

</mosaic_0001>

<llo_original>
// kernel: tpu_custom_call.1
$region0: #{tpu_custom_call.1}
  #allocation0 [shape = 'u32[]', space=smem, size = 0x4, offset = 0x4, fixed_abs, tag = 'smem constant byte address 0x4 - core index']
  #allocation1 [shape = 'u32[144,128]{1,0:T(1,128)}', space=vmem, size = 0x12000, scoped, tag = 'internal scratch']
  %s0 = inlined_call_operand.hbm [shape: f32[8,2,32], index: 0, kind: input, shape index: {}]
  %s1 = inlined_call_operand.hbm [shape: f32[8,32], index: 1, kind: input, shape index: {}]
  %s2 = inlined_call_operand.hbm [shape: f32[8,2,32], index: 2, kind: output, shape index: {}]
  %s3 = sld [smem:[#allocation0]]
  $region26: #{tpu_custom_call.1} parent=0
    _
  %s5 = ssub.s32 1, %s3
  %s6 = scalar_select 0, %s5, %s3
  $region1: #{tpu_custom_call.1} parent=0
    #allocation2 [shape = 'u8[8192]{0}', space=vmem, size = 0x2000, scoped, tag = 'input window, operand 0, single buffered']
    #allocation3 [shape = 's32[1]{0}', space=sflag, size = 0x4, scoped, tag = 'scoped memory for tpu_custom_call.1']
    #allocation4 [shape = 's32[1]{0}', space=sflag, size = 0x4, scoped, tag = 'scoped memory for tpu_custom_call.1']
    #allocation5 [shape = 'u8[4096]{0}', space=vmem, size = 0x1000, scoped, tag = 'input window, operand 1, single buffered']
    #allocation6 [shape = 's32[1]{0}', space=sflag, size = 0x4, scoped, tag = 'scoped memory for tpu_custom_call.1']
    #allocation7 [shape = 'u8[8192]{0}', space=vmem, size = 0x2000, scoped, tag = 'output window, operand 0, single buffered']
    %7 = vsyncpa [#allocation3], 0
    %8 = vsyncpa [#allocation6], 0
    %9 = vsyncpa [#allocation4], 0
    // Predicated region
    $region2: #{tpu_custom_call.1} parent=1 // pred_check
      _
    $region3: #{tpu_custom_call.1} parent=1 // pred_check_branch
      %11 = sbr.rel (0) target = $region5
    $region4: #{tpu_custom_call.1} parent=1 // pred_region
      %s13 = ssub.s32 256, 256
      %14 = vsyncadd [#allocation3], %s13
      %s15 = sshll.u32 [#allocation2], 4
      %s16 = int_to_ptr.vmem [resolvable:$true] %s15
      %21 = dma.hbm_to_vmem [thread:$0]  %s0, 256, %s16, [#allocation3], 32, 32, 2
    $region5: #{tpu_custom_call.1} parent=1 // pred_fallthru
      _
    // Predicated region
    $region6: #{tpu_custom_call.1} parent=1 // pred_check
      _
    $region7: #{tpu_custom_call.1} parent=1 // pred_check_branch
      %23 = sbr.rel (0) target = $region9
    $region8: #{tpu_custom_call.1} parent=1 // pred_region
      %s25 = ssub.s32 128, 128
      %26 = vsyncadd [#allocation6], %s25
      %s28 = sshll.u32 [#allocation5], 4
      %s29 = int_to_ptr.vmem [resolvable:$true] %s28
      %31 = dma.hbm_to_vmem [thread:$0]  %s1, 128, %s29, [#allocation6]
    $region9: #{tpu_custom_call.1} parent=1 // pred_fallthru
      _
    // Predicated region
    $region10: #{tpu_custom_call.1} parent=1 // pred_check
      _
    $region11: #{tpu_custom_call.1} parent=1 // pred_check_branch
      %33 = sbr.rel (0) target = $region13
    $region12: #{tpu_custom_call.1} parent=1 // pred_region
      %34 = dma.done [#allocation3], 256
    $region13: #{tpu_custom_call.1} parent=1 // pred_fallthru
      _
    // Predicated region
    $region14: #{tpu_custom_call.1} parent=1 // pred_check
      _
    $region15: #{tpu_custom_call.1} parent=1 // pred_check_branch
      %36 = sbr.rel (0) target = $region17
    $region16: #{tpu_custom_call.1} parent=1 // pred_region
      %37 = dma.done [#allocation6], 128
    $region17: #{tpu_custom_call.1} parent=1 // pred_fallthru
      _
    %v38 = vld [vmem:[#allocation2] sm:$0x3]
    %v39 = vld [vmem:[#allocation2 + $0x2] sm:$0x3]
    %v40 = vld [vmem:[#allocation2 + $0x4] sm:$0x3]
    %v41 = vld [vmem:[#allocation2 + $0x6] sm:$0x3]
    %v42 = vld [vmem:[#allocation2 + $0x8] sm:$0x3]
    %v43 = vld [vmem:[#allocation2 + $0xa] sm:$0x3]
    %v44 = vld [vmem:[#allocation2 + $0xc] sm:$0x3]
    %v45 = vld [vmem:[#allocation2 + $0xe] sm:$0x3]
    %v46 = vld [vmem:[#allocation5] sm:$0xff]
    %v48 = vcombine.high %v46, %v46
    %v50 = vunpack.c.l.s4 1966171168
    %v51 = vunpack.c.0.s8 %v50
    %v52 = vlaneseq
    %v53 = vshrl.u32 %v52, 7
    %v54 = vsub.s32 %v51, %v53
    %v55 = vrot.slane %v46, %v54
    %v57 = vunpack.c.l.s4 1966171168
    %v58 = vunpack.c.0.s8 %v57
    %v59 = vlaneseq
    %v60 = vshrl.u32 %v59, 7
    %v61 = vsub.s32 %v58, %v60
    %v62 = vrot.slane %v48, %v61
    %v63 = vcombine.high %v55, %v55
    %v64 = vcombine.high %v62, %v62
    %v66 = vunpack.c.l.s4 1966171168
    %v67 = vunpack.c.0.s8 %v66
    %v68 = vlaneseq
    %v69 = vshrl.u32 %v68, 7
    %v70 = vsub.s32 %v67, %v69
    %v71 = vrot.slane %v55, %v70
    %v73 = vunpack.c.l.s4 1966171168
    %v74 = vunpack.c.0.s8 %v73
    %v75 = vlaneseq
    %v76 = vshrl.u32 %v75, 7
    %v77 = vsub.s32 %v74, %v76
    %v78 = vrot.slane %v62, %v77
    %v80 = vunpack.c.l.s4 1966171168
    %v81 = vunpack.c.0.s8 %v80
    %v82 = vlaneseq
    %v83 = vshrl.u32 %v82, 7
    %v84 = vsub.s32 %v81, %v83
    %v85 = vrot.slane %v63, %v84
    %v87 = vunpack.c.l.s4 1966171168
    %v88 = vunpack.c.0.s8 %v87
    %v89 = vlaneseq
    %v90 = vshrl.u32 %v89, 7
    %v91 = vsub.s32 %v88, %v90
    %v92 = vrot.slane %v64, %v91
    %v93 = vcombine.high %v71, %v71
    %v94 = vcombine.high %v78, %v78
    %v95 = vcombine.high %v85, %v85
    %v96 = vcombine.high %v92, %v92
    %v97 = vlaneseq
    %v98 = vshrl.u32 %v97, 7
    %v99 = vsub.s32 0, %v98
    %v100 = vrot.slane %v71, %v99
    %v101 = vlaneseq
    %v102 = vshrl.u32 %v101, 7
    %v103 = vsub.s32 0, %v102
    %v104 = vrot.slane %v85, %v103
    %v105 = vlaneseq
    %v106 = vshrl.u32 %v105, 7
    %v107 = vsub.s32 0, %v106
    %v108 = vrot.slane %v93, %v107
    %v109 = vlaneseq
    %v110 = vshrl.u32 %v109, 7
    %v111 = vsub.s32 0, %v110
    %v112 = vrot.slane %v95, %v111
    %v113 = vlaneseq
    %v114 = vshrl.u32 %v113, 7
    %v115 = vsub.s32 0, %v114
    %v116 = vrot.slane %v78, %v115
    %v117 = vlaneseq
    %v118 = vshrl.u32 %v117, 7
    %v119 = vsub.s32 0, %v118
    %v120 = vrot.slane %v92, %v119
    %v121 = vlaneseq
    %v122 = vshrl.u32 %v121, 7
    %v123 = vsub.s32 0, %v122
    %v124 = vrot.slane %v94, %v123
    %v125 = vlaneseq
    %v126 = vshrl.u32 %v125, 7
    %v127 = vsub.s32 0, %v126
    %v128 = vrot.slane %v96, %v127
    %v137 = vadd.f32 %v38, %v100
    %v138 = vadd.f32 %v39, %v104
    %v139 = vadd.f32 %v40, %v108
    %v140 = vadd.f32 %v41, %v112
    %v141 = vadd.f32 %v42, %v116
    %v142 = vadd.f32 %v43, %v120
    %v143 = vadd.f32 %v44, %v124
    %v144 = vadd.f32 %v45, %v128
    %vm145 = vcmask 254976
    %146 = vst.msk [vmem:[#allocation7] sm:$0x3] %vm145, %v137
    %147 = vst.msk [vmem:[#allocation7 + $0x2] sm:$0x3] %vm145, %v138
    %148 = vst.msk [vmem:[#allocation7 + $0x4] sm:$0x3] %vm145, %v139
    %149 = vst.msk [vmem:[#allocation7 + $0x6] sm:$0x3] %vm145, %v140
    %150 = vst.msk [vmem:[#allocation7 + $0x8] sm:$0x3] %vm145, %v141
    %151 = vst.msk [vmem:[#allocation7 + $0xa] sm:$0x3] %vm145, %v142
    %152 = vst.msk [vmem:[#allocation7 + $0xc] sm:$0x3] %vm145, %v143
    %153 = vst.msk [vmem:[#allocation7 + $0xe] sm:$0x3] %vm145, %v144
    // Predicated region
    $region18: #{tpu_custom_call.1} parent=1 // pred_check
      _
    $region19: #{tpu_custom_call.1} parent=1 // pred_check_branch
      %155 = sbr.rel (0) target = $region21
    $region20: #{tpu_custom_call.1} parent=1 // pred_region
      %s157 = ssub.s32 256, 256
      %158 = vsyncadd [#allocation4], %s157
      %s159 = sshll.u32 [#allocation7], 4
      %s160 = int_to_ptr.vmem [resolvable:$true] %s159
      %165 = dma.vmem_to_hbm [thread:$0]  %s160, 256, %s2, [#allocation4], 32, 32, 2
    $region21: #{tpu_custom_call.1} parent=1 // pred_fallthru
      _
    // Predicated region
    $region22: #{tpu_custom_call.1} parent=1 // pred_check
      _
    $region23: #{tpu_custom_call.1} parent=1 // pred_check_branch
      %167 = sbr.rel (0) target = $region25
    $region24: #{tpu_custom_call.1} parent=1 // pred_region
      %168 = dma.done [#allocation4], 256
    $region25: #{tpu_custom_call.1} parent=1 // pred_fallthru
      _
    %169 = vsyncpa [#allocation3], 1
    %170 = vsyncpa [#allocation6], 1
    %171 = vsyncpa [#allocation4], 1

</llo_original>
